<compile_context>
chip_gen: v7x
topology: tpu7x:2x2x1
jax: 0.10.0
libtpu: 0.0.40
codegen_flags: <defaults>
</compile_context>

<pallas_src>
import functools

import jax
import jax.numpy as jnp
from jax.experimental import pallas as pl
from jax.experimental.pallas import tpu as pltpu


def _mlp_kernel(n_layers, *refs):
    """Chained dense layers: h = relu(h @ W_bd + b); all operands VMEM-resident."""
    x_ref = refs[0]
    w_refs = refs[1:1 + n_layers]
    b_refs = refs[1 + n_layers:1 + 2 * n_layers]
    o_ref = refs[1 + 2 * n_layers]

    h = x_ref[...]  # (TILE_B, T*F) float32
    for w_ref, b_ref in zip(w_refs, b_refs):
        h = jnp.dot(h, w_ref[...], preferred_element_type=jnp.float32)
        h = jnp.maximum(h + b_ref[...], 0.0)  # every Linear is followed by ReLU
    o_ref[...] = h.astype(o_ref.dtype)


def _block_diag(w):
    """[T, d_in, d_out] -> block-diagonal [T*d_in, T*d_out]."""
    T, d_in, d_out = w.shape
    eye = jnp.eye(T, dtype=w.dtype)
    wbd = jnp.einsum('tio,ts->tiso', w, eye)  # zero out cross-timestep blocks
    return wbd.reshape(T * d_in, T * d_out)


def _choose_tile_b(B):
    # Whole batch in one grid step when small; otherwise tile in multiples of 8
    # (keeps the (8,128) layout rule and lets v7x's two TensorCores share work).
    if B % 8 != 0 or B <= 128:
        return B
    for cand in (128, 64, 32, 16, 8):
        if B % cand == 0:
            return cand
    return B


def position_wise_mlp(x, weights, biases):
    """
    x:       [B, T, F] float32
    weights: list (length n_posmlp_layers) of [T, d_in, d_out]
    biases:  list (length n_posmlp_layers) of [T, 1, d_out]
    returns: [B, T, F] float32
    """
    B, T, F = x.shape
    n_layers = len(weights)

    # Free, contiguous reshapes (no HBM transposes).
    x2d = x.reshape(B, T * F)
    w_bd = [_block_diag(w) for w in weights]               # [T*d_in, T*d_out]
    b_pk = [b.reshape(1, T * b.shape[2]) for b in biases]  # [1,  T*d_out]

    tile_b = _choose_tile_b(B)
    grid = (B // tile_b,)

    in_specs = [pl.BlockSpec((tile_b, T * F), lambda i: (i, 0))]
    for w in w_bd:
        in_specs.append(pl.BlockSpec(w.shape, lambda i: (0, 0)))  # resident
    for b in b_pk:
        in_specs.append(pl.BlockSpec(b.shape, lambda i: (0, 0)))  # resident

    out2d = pl.pallas_call(
        functools.partial(_mlp_kernel, n_layers),
        out_shape=jax.ShapeDtypeStruct((B, T * F), x.dtype),
        grid_spec=pltpu.PrefetchScalarGridSpec(
            num_scalar_prefetch=0,
            grid=grid,
            in_specs=in_specs,
            out_specs=pl.BlockSpec((tile_b, T * F), lambda i: (i, 0)),
        ),
        compiler_params=pltpu.CompilerParams(
            dimension_semantics=("parallel",)),
    )(x2d, *w_bd, *b_pk)

    return out2d.reshape(B, T, F)


def init_params(key, n_features, n_timesteps, n_neurons, n_posmlp_layers):
    """Deterministic synthetic init mimicking nn.Linear's uniform(-1/sqrt(fan_in))."""
    assert n_posmlp_layers >= 2
    dims = ([(n_features, n_neurons)]
            + [(n_neurons, n_neurons)] * (n_posmlp_layers - 2)
            + [(n_neurons, n_features)])
    weights, biases = [], []
    for (d_in, d_out) in dims:
        key, kw, kb = jax.random.split(key, 3)
        bound = 1.0 / jnp.sqrt(float(d_in))
        w = jax.random.uniform(kw, (n_timesteps, d_in, d_out),
                               jnp.float32, -bound, bound)
        b = jax.random.uniform(kb, (n_timesteps, 1, d_out),
                               jnp.float32, -bound, bound)
        weights.append(w)
        biases.append(b)
    return weights, biases


def reference_forward(x, weights, biases):
    """Pure-JAX reference reproducing the PyTorch per-timestep loop semantics."""
    B, T, F = x.shape
    outs = []
    for i in range(T):
        h = x[:, i, :]
        for w, b in zip(weights, biases):
            h = jnp.maximum(h @ w[i] + b[i], 0.0)
        outs.append(h[:, None, :])
    return jnp.concatenate(outs, axis=1)


if __name__ == "__main__":
    # Small shapes consistent with the module:
    # n_features=16, n_previous_timesteps=3 -> T=4, n_neurons=32, layers=2, batch=8
    B, T, F, N, L = 8, 4, 16, 32, 2

    key = jax.random.PRNGKey(0)
    key, kx = jax.random.split(key)
    x = jax.random.normal(kx, (B, T, F), jnp.float32)

    weights, biases = init_params(key, F, T, N, L)

    y = position_wise_mlp(x, weights, biases)
    y = jax.block_until_ready(y)

    y_ref = reference_forward(x, weights, biases)
    assert y.shape == (B, T, F)
    assert jnp.allclose(y, y_ref, atol=1e-5, rtol=1e-5)

    print("KERNEL_OK")
</pallas_src>

<mosaic_0001>
module attributes {stable_mosaic.version = 11 : i64} {
  func.func @_mlp_kernel(%arg0: i32, %arg1: memref<8x64xf32, #tpu.memory_space<vmem>>, %arg2: memref<64x128xf32, #tpu.memory_space<vmem>>, %arg3: memref<128x64xf32, #tpu.memory_space<vmem>>, %arg4: memref<1x128xf32, #tpu.memory_space<vmem>>, %arg5: memref<1x64xf32, #tpu.memory_space<vmem>>, %arg6: memref<8x64xf32, #tpu.memory_space<vmem>>) attributes {dimension_semantics = [#tpu.dimension_semantics<parallel>], iteration_bounds = array<i64: 1>, scalar_prefetch = 0 : i64, scratch_operands = 0 : i64, tpu.core_type = #tpu.core_type<tc>, window_params = [{transform_indices = @transform_0, window_bounds = array<i64: 8, 64>}, {pipeline_mode = #tpu.pipeline_mode<synchronous>, transform_indices = @transform_1, window_bounds = array<i64: 64, 128>}, {pipeline_mode = #tpu.pipeline_mode<synchronous>, transform_indices = @transform_2, window_bounds = array<i64: 128, 64>}, {pipeline_mode = #tpu.pipeline_mode<synchronous>, transform_indices = @transform_3, window_bounds = array<i64: 1, 128>}, {pipeline_mode = #tpu.pipeline_mode<synchronous>, transform_indices = @transform_4, window_bounds = array<i64: 1, 64>}, {transform_indices = @transform_5, window_bounds = array<i64: 8, 64>}]} {
    %c0 = arith.constant 0 : index
    %c0_0 = arith.constant 0 : index
    %0 = vector.load %arg1[%c0, %c0_0] : memref<8x64xf32, #tpu.memory_space<vmem>>, vector<8x64xf32>
    %c0_1 = arith.constant 0 : index
    %c0_2 = arith.constant 0 : index
    %1 = vector.load %arg2[%c0_1, %c0_2] : memref<64x128xf32, #tpu.memory_space<vmem>>, vector<64x128xf32>
    %cst = arith.constant dense<0.000000e+00> : vector<8x128xf32>
    %2 = tpu.matmul %0, %1, %cst {dimension_numbers = #tpu.dot_dimension_numbers<[1], [0], [0], [1], [0, 0, 1, 1], [], []>} : vector<8x64xf32>, vector<64x128xf32>, vector<8x128xf32> -> vector<8x128xf32>
    %c0_3 = arith.constant 0 : index
    %c0_4 = arith.constant 0 : index
    %3 = vector.load %arg4[%c0_3, %c0_4] : memref<1x128xf32, #tpu.memory_space<vmem>>, vector<1x128xf32>
    %4 = vector.broadcast %3 : vector<1x128xf32> to vector<8x128xf32>
    %5 = arith.addf %2, %4 : vector<8x128xf32>
    %cst_5 = arith.constant 0.000000e+00 : f32
    %6 = vector.broadcast %cst_5 : f32 to vector<8x128xf32>
    %7 = arith.maximumf %5, %6 : vector<8x128xf32>
    %c0_6 = arith.constant 0 : index
    %c0_7 = arith.constant 0 : index
    %8 = vector.load %arg3[%c0_6, %c0_7] : memref<128x64xf32, #tpu.memory_space<vmem>>, vector<128x64xf32>
    %cst_8 = arith.constant dense<0.000000e+00> : vector<8x64xf32>
    %9 = tpu.matmul %7, %8, %cst_8 {dimension_numbers = #tpu.dot_dimension_numbers<[1], [0], [0], [1], [0, 0, 1, 1], [], []>} : vector<8x128xf32>, vector<128x64xf32>, vector<8x64xf32> -> vector<8x64xf32>
    %c0_9 = arith.constant 0 : index
    %c0_10 = arith.constant 0 : index
    %10 = vector.load %arg5[%c0_9, %c0_10] : memref<1x64xf32, #tpu.memory_space<vmem>>, vector<1x64xf32>
    %11 = vector.broadcast %10 : vector<1x64xf32> to vector<8x64xf32>
    %12 = arith.addf %9, %11 : vector<8x64xf32>
    %cst_11 = arith.constant 0.000000e+00 : f32
    %13 = vector.broadcast %cst_11 : f32 to vector<8x64xf32>
    %14 = arith.maximumf %12, %13 : vector<8x64xf32>
    %c0_12 = arith.constant 0 : index
    %c0_13 = arith.constant 0 : index
    %15 = vector.load %arg6[%c0_12, %c0_13] : memref<8x64xf32, #tpu.memory_space<vmem>>, vector<8x64xf32>
    tpu.vector_store %arg6[%c0_12, %c0_13], %14 {strides = array<i32>} : memref<8x64xf32, #tpu.memory_space<vmem>>, vector<8x64xf32>,
    return
  }
  func.func @transform_0(%arg0: i32) -> (i32, i32) {
    %c0_i32 = arith.constant 0 : i32
    %c0_i32_0 = arith.constant 0 : i32
    return %arg0, %c0_i32 : i32, i32
  }
  func.func @transform_1(%arg0: i32) -> (i32, i32) {
    %c0_i32 = arith.constant 0 : i32
    %c0_i32_0 = arith.constant 0 : i32
    %c0_i32_1 = arith.constant 0 : i32
    return %c0_i32, %c0_i32_0 : i32, i32
  }
  func.func @transform_2(%arg0: i32) -> (i32, i32) {
    %c0_i32 = arith.constant 0 : i32
    %c0_i32_0 = arith.constant 0 : i32
    %c0_i32_1 = arith.constant 0 : i32
    return %c0_i32, %c0_i32_0 : i32, i32
  }
  func.func @transform_3(%arg0: i32) -> (i32, i32) {
    %c0_i32 = arith.constant 0 : i32
    %c0_i32_0 = arith.constant 0 : i32
    %c0_i32_1 = arith.constant 0 : i32
    return %c0_i32, %c0_i32_0 : i32, i32
  }
  func.func @transform_4(%arg0: i32) -> (i32, i32) {
    %c0_i32 = arith.constant 0 : i32
    %c0_i32_0 = arith.constant 0 : i32
    %c0_i32_1 = arith.constant 0 : i32
    return %c0_i32, %c0_i32_0 : i32, i32
  }
  func.func @transform_5(%arg0: i32) -> (i32, i32) {
    %c0_i32 = arith.constant 0 : i32
    %c0_i32_0 = arith.constant 0 : i32
    return %arg0, %c0_i32 : i32, i32
  }
}

</mosaic_0001>

<llo_original>
// kernel: tpu_custom_call.1
$region0: #{tpu_custom_call.1}
  #allocation0 [shape = 'u32[]', space=smem, size = 0x4, offset = 0x4, fixed_abs, tag = 'smem constant byte address 0x4 - core index']
  #allocation1 [shape = 'u32[144,128]{1,0:T(1,128)}', space=vmem, size = 0x12000, scoped, tag = 'internal scratch']
  %s0 = inlined_call_operand.vmem [shape: f32[8,64], index: 0, kind: input, shape index: {}]
  %s1 = inlined_call_operand.vmem [shape: f32[64,128], index: 1, kind: input, shape index: {}]
  %s2 = inlined_call_operand.vmem [shape: f32[128,64], index: 2, kind: input, shape index: {}]
  %s3 = inlined_call_operand.vmem [shape: f32[1,128], index: 3, kind: input, shape index: {}]
  %s4 = inlined_call_operand.vmem [shape: f32[1,64], index: 4, kind: input, shape index: {}]
  %s5 = inlined_call_operand.hbm [shape: f32[8,64], index: 5, kind: output, shape index: {}]
  %s6 = sld [smem:[#allocation0]]
  $region30: #{tpu_custom_call.1} parent=0
    _
  %s8 = ssub.s32 1, %s6
  %s9 = scalar_select 0, %s8, %s6
  $region1: #{tpu_custom_call.1} parent=0
    #allocation2 [shape = 'u8[4096]{0}', space=vmem, size = 0x1000, scoped, tag = 'output window, operand 0, single buffered']
    #allocation3 [shape = 's32[1]{0}', space=sflag, size = 0x4, scoped, tag = 'scoped memory for tpu_custom_call.1']
    %10 = vsyncpa [#allocation3], 0
    // Predicated region
    $region2: #{tpu_custom_call.1} parent=1 // pred_check
      _
    $region3: #{tpu_custom_call.1} parent=1 // pred_check_branch
      %12 = sbr.rel (0) target = $region5
    $region4: #{tpu_custom_call.1} parent=1 // pred_region
      _
    $region5: #{tpu_custom_call.1} parent=1 // pred_fallthru
      _
    // Predicated region
    $region6: #{tpu_custom_call.1} parent=1 // pred_check
      _
    $region7: #{tpu_custom_call.1} parent=1 // pred_check_branch
      %14 = sbr.rel (0) target = $region9
    $region8: #{tpu_custom_call.1} parent=1 // pred_region
      _
    $region9: #{tpu_custom_call.1} parent=1 // pred_fallthru
      _
    // Predicated region
    $region10: #{tpu_custom_call.1} parent=1 // pred_check
      _
    $region11: #{tpu_custom_call.1} parent=1 // pred_check_branch
      %16 = sbr.rel (0) target = $region13
    $region12: #{tpu_custom_call.1} parent=1 // pred_region
      _
    $region13: #{tpu_custom_call.1} parent=1 // pred_fallthru
      _
    // Predicated region
    $region14: #{tpu_custom_call.1} parent=1 // pred_check
      _
    $region15: #{tpu_custom_call.1} parent=1 // pred_check_branch
      %18 = sbr.rel (0) target = $region17
    $region16: #{tpu_custom_call.1} parent=1 // pred_region
      _
    $region17: #{tpu_custom_call.1} parent=1 // pred_fallthru
      _
    // Predicated region
    $region18: #{tpu_custom_call.1} parent=1 // pred_check
      _
    $region19: #{tpu_custom_call.1} parent=1 // pred_check_branch
      %20 = sbr.rel (0) target = $region21
    $region20: #{tpu_custom_call.1} parent=1 // pred_region
      _
    $region21: #{tpu_custom_call.1} parent=1 // pred_fallthru
      _
    %v21 = vld [vmem:[%s0] sm:$0xff]
    %v22 = vld [vmem:[%s1] sm:$0xff]
    %v23 = vld [vmem:[%s1 + $0x8] sm:$0xff]
    %v24 = vld [vmem:[%s1 + $0x10] sm:$0xff]
    %v25 = vld [vmem:[%s1 + $0x18] sm:$0xff]
    %v26 = vld [vmem:[%s1 + $0x20] sm:$0xff]
    %v27 = vld [vmem:[%s1 + $0x28] sm:$0xff]
    %v28 = vld [vmem:[%s1 + $0x30] sm:$0xff]
    %v29 = vld [vmem:[%s1 + $0x38] sm:$0xff]
    %v30 = vld [vmem:[%s3] sm:$0x1]
    %v32 = vlaneseq
    %v33 = vshrl.u32 %v32, 7
    %v34 = vsub.s32 0, %v33
    %v35 = vrot.slane %v30, %v34
    %vm37 = vcmask 523264
    %v39 = vsel %vm37, %v21, 0
    %41 = vmatprep.subr.mxu0 0.0
    %42 = vmatpush1.msra.mxu0 %v22
    %43 = vmatprep.subr.mxu0 0.0
    %44 = vmatpush1.msra.mxu0 %v23
    %45 = vmatprep.subr.mxu0 0.0
    %46 = vmatpush1.msra.mxu0 %v24
    %47 = vmatprep.subr.mxu0 0.0
    %48 = vmatpush1.msra.mxu0 %v25
    %49 = vmatprep.subr.mxu0 0.0
    %50 = vmatpush1.msra.mxu0 %v26
    %51 = vmatprep.subr.mxu0 0.0
    %52 = vmatpush1.msra.mxu0 %v27
    %53 = vmatprep.subr.mxu0 0.0
    %54 = vmatpush1.msra.mxu0 %v28
    %55 = vmatprep.subr.mxu0 0.0
    %56 = vmatpush1.msra.mxu0 %v29
    %57 = vmatprep.subr.mxu0 0.0
    %58 = vmatpush1.msra.mxu0 0.0
    %59 = vmatprep.subr.mxu0 0.0
    %60 = vmatpush1.msra.mxu0 0.0
    %61 = vmatprep.subr.mxu0 0.0
    %62 = vmatpush1.msra.mxu0 0.0
    %63 = vmatprep.subr.mxu0 0.0
    %64 = vmatpush1.msra.mxu0 0.0
    %65 = vmatprep.subr.mxu0 0.0
    %66 = vmatpush1.msra.mxu0 0.0
    %67 = vmatprep.subr.mxu0 0.0
    %68 = vmatpush1.msra.mxu0 0.0
    %69 = vmatprep.subr.mxu0 0.0
    %70 = vmatpush1.msra.mxu0 0.0
    %71 = vmatprep.subr.mxu0 0.0
    %72 = vmatpush1.msra.mxu0 0.0
    %73 = vmatprep.subr.mxu0 0.0
    %74 = vmatpush1.msra.mxu0 0.0
    %75 = vmatprep.subr.mxu0 0.0
    %76 = vmatpush1.msra.mxu0 0.0
    %77 = vmatprep.subr.mxu0 0.0
    %78 = vmatpush1.msra.mxu0 0.0
    %79 = vmatprep.subr.mxu0 0.0
    %80 = vmatpush1.msra.mxu0 0.0
    %81 = vmatprep.subr.mxu0 0.0
    %82 = vmatpush1.msra.mxu0 0.0
    %83 = vmatprep.subr.mxu0 0.0
    %84 = vmatpush1.msra.mxu0 0.0
    %85 = vmatprep.subr.mxu0 0.0
    %86 = vmatpush1.msra.mxu0 0.0
    %87 = vmatprep.subr.mxu0 0.0
    %88 = vmatpush1.msra.mxu0 0.0
    %89 = vmatprep.subr.mxu0 0.0
    %90 = vmatpush1.msra.mxu0 0.0
    %91 = vmatprep.subr.mxu0 0.0
    %92 = vmatpush1.msra.mxu0 0.0
    %93 = vmatprep.subr.mxu0 0.0
    %94 = vmatpush1.msra.mxu0 0.0
    %95 = vmatprep.subr.mxu0 0.0
    %96 = vmatpush1.msra.mxu0 0.0
    %97 = vmatprep.subr.mxu0 0.0
    %98 = vmatpush1.msra.mxu0 0.0
    %99 = vmatprep.subr.mxu0 0.0
    %100 = vmatpush1.msra.mxu0 0.0
    %101 = vmatprep.subr.mxu0 0.0
    %102 = vmatpush1.msra.mxu0 0.0
    %103 = vmatprep.subr.mxu0 0.0
    %104 = vmatpush1.msra.mxu0 0.0
    %105 = vmatprep.mubr.f32.mxu0 0.0
    %106 = vmatmul.mubr.f32.gmra.mrb[0].mxu0 %v39
    %v107 = vpop.f32.mrb[0].mxu0
    %v108 = vadd.f32 %v35, %v107
    %v109 = vpop.f32.mrb[0].mxu0
    %110 = vdwg.mxu0
    %v111 = vmax.f32 %v108, 0.0
    %v112 = vld [vmem:[%s2] sm:$0xff]
    %v113 = vld [vmem:[%s2 + $0x8] sm:$0xff]
    %v114 = vld [vmem:[%s2 + $0x10] sm:$0xff]
    %v115 = vld [vmem:[%s2 + $0x18] sm:$0xff]
    %v116 = vld [vmem:[%s2 + $0x20] sm:$0xff]
    %v117 = vld [vmem:[%s2 + $0x28] sm:$0xff]
    %v118 = vld [vmem:[%s2 + $0x30] sm:$0xff]
    %v119 = vld [vmem:[%s2 + $0x38] sm:$0xff]
    %v120 = vld [vmem:[%s2 + $0x40] sm:$0xff]
    %v121 = vld [vmem:[%s2 + $0x48] sm:$0xff]
    %v122 = vld [vmem:[%s2 + $0x50] sm:$0xff]
    %v123 = vld [vmem:[%s2 + $0x58] sm:$0xff]
    %v124 = vld [vmem:[%s2 + $0x60] sm:$0xff]
    %v125 = vld [vmem:[%s2 + $0x68] sm:$0xff]
    %v126 = vld [vmem:[%s2 + $0x70] sm:$0xff]
    %v127 = vld [vmem:[%s2 + $0x78] sm:$0xff]
    %v128 = vld [vmem:[%s4] sm:$0x1]
    %v130 = vlaneseq
    %v131 = vshrl.u32 %v130, 7
    %v132 = vsub.s32 0, %v131
    %v133 = vrot.slane %v128, %v132
    %135 = vmatprep.subr.mxu0 0.0
    %136 = vmatpush1.msra.mxu0 %v112
    %137 = vmatprep.subr.mxu0 0.0
    %138 = vmatpush1.msra.mxu0 %v113
    %139 = vmatprep.subr.mxu0 0.0
    %140 = vmatpush1.msra.mxu0 %v114
    %141 = vmatprep.subr.mxu0 0.0
    %142 = vmatpush1.msra.mxu0 %v115
    %143 = vmatprep.subr.mxu0 0.0
    %144 = vmatpush1.msra.mxu0 %v116
    %145 = vmatprep.subr.mxu0 0.0
    %146 = vmatpush1.msra.mxu0 %v117
    %147 = vmatprep.subr.mxu0 0.0
    %148 = vmatpush1.msra.mxu0 %v118
    %149 = vmatprep.subr.mxu0 0.0
    %150 = vmatpush1.msra.mxu0 %v119
    %151 = vmatprep.subr.mxu0 0.0
    %152 = vmatpush1.msra.mxu0 %v120
    %153 = vmatprep.subr.mxu0 0.0
    %154 = vmatpush1.msra.mxu0 %v121
    %155 = vmatprep.subr.mxu0 0.0
    %156 = vmatpush1.msra.mxu0 %v122
    %157 = vmatprep.subr.mxu0 0.0
    %158 = vmatpush1.msra.mxu0 %v123
    %159 = vmatprep.subr.mxu0 0.0
    %160 = vmatpush1.msra.mxu0 %v124
    %161 = vmatprep.subr.mxu0 0.0
    %162 = vmatpush1.msra.mxu0 %v125
    %163 = vmatprep.subr.mxu0 0.0
    %164 = vmatpush1.msra.mxu0 %v126
    %165 = vmatprep.subr.mxu0 0.0
    %166 = vmatpush1.msra.mxu0 %v127
    %167 = vmatprep.subr.mxu0 0.0
    %168 = vmatpush1.msra.mxu0 0.0
    %169 = vmatprep.subr.mxu0 0.0
    %170 = vmatpush1.msra.mxu0 0.0
    %171 = vmatprep.subr.mxu0 0.0
    %172 = vmatpush1.msra.mxu0 0.0
    %173 = vmatprep.subr.mxu0 0.0
    %174 = vmatpush1.msra.mxu0 0.0
    %175 = vmatprep.subr.mxu0 0.0
    %176 = vmatpush1.msra.mxu0 0.0
    %177 = vmatprep.subr.mxu0 0.0
    %178 = vmatpush1.msra.mxu0 0.0
    %179 = vmatprep.subr.mxu0 0.0
    %180 = vmatpush1.msra.mxu0 0.0
    %181 = vmatprep.subr.mxu0 0.0
    %182 = vmatpush1.msra.mxu0 0.0
    %183 = vmatprep.subr.mxu0 0.0
    %184 = vmatpush1.msra.mxu0 0.0
    %185 = vmatprep.subr.mxu0 0.0
    %186 = vmatpush1.msra.mxu0 0.0
    %187 = vmatprep.subr.mxu0 0.0
    %188 = vmatpush1.msra.mxu0 0.0
    %189 = vmatprep.subr.mxu0 0.0
    %190 = vmatpush1.msra.mxu0 0.0
    %191 = vmatprep.subr.mxu0 0.0
    %192 = vmatpush1.msra.mxu0 0.0
    %193 = vmatprep.subr.mxu0 0.0
    %194 = vmatpush1.msra.mxu0 0.0
    %195 = vmatprep.subr.mxu0 0.0
    %196 = vmatpush1.msra.mxu0 0.0
    %197 = vmatprep.subr.mxu0 0.0
    %198 = vmatpush1.msra.mxu0 0.0
    %199 = vmatprep.mubr.f32.mxu0 0.0
    %200 = vmatmul.mubr.f32.gmra.mrb[0].mxu0 %v111
    %v201 = vpop.f32.mrb[0].mxu0
    %v202 = vadd.f32 %v133, %v201
    %v203 = vpop.f32.mrb[0].mxu0
    %204 = vdwg.mxu0
    %v205 = vmax.f32 %v202, 0.0
    %206 = vst.msk [vmem:[#allocation2] sm:$0xff] %vm37, %v205
    // Predicated region
    $region22: #{tpu_custom_call.1} parent=1 // pred_check
      _
    $region23: #{tpu_custom_call.1} parent=1 // pred_check_branch
      %208 = sbr.rel (0) target = $region25
    $region24: #{tpu_custom_call.1} parent=1 // pred_region
      %s210 = ssub.s32 128, 128
      %211 = vsyncadd [#allocation3], %s210
      %s213 = sshll.u32 [#allocation2], 4
      %s214 = int_to_ptr.vmem [resolvable:$true] %s213
      %216 = dma.vmem_to_hbm [thread:$0]  %s214, 128, %s5, [#allocation3]
    $region25: #{tpu_custom_call.1} parent=1 // pred_fallthru
      _
    // Predicated region
    $region26: #{tpu_custom_call.1} parent=1 // pred_check
      _
    $region27: #{tpu_custom_call.1} parent=1 // pred_check_branch
      %218 = sbr.rel (0) target = $region29
    $region28: #{tpu_custom_call.1} parent=1 // pred_region
      %219 = dma.done [#allocation3], 128
    $region29: #{tpu_custom_call.1} parent=1 // pred_fallthru
      _
    %220 = vsyncpa [#allocation3], 1

</llo_original>
